<compile_context>
chip_gen: v7x
topology: tpu7x:2x2x1
jax: 0.10.0
libtpu: 0.0.40
codegen_flags: <defaults>
</compile_context>

<pallas_src>
import functools

import jax
import jax.numpy as jnp
import numpy as np
from jax.experimental import pallas as pl
from jax.experimental.pallas import tpu as pltpu

BN_EPS = 1e-5


def _round_up(x, m):
    return ((x + m - 1) // m) * m


def _vmem_limit_bytes():
    """min(96 MiB, 3/4 of physical VMEM): ~96 MiB on v5e/v6e (128 MiB), ~48 MiB on v7x (64 MiB)."""
    try:
        cap = int(pltpu.get_tpu_info().vmem_capacity_bytes)
        return min(96 * 1024 * 1024, (cap * 3) // 4)
    except Exception:
        return 64 * 1024 * 1024


# ----------------------------------------------------------------------------- kernels
def conv_stats_kernel(p_ref, w_ref, y_ref, stats_ref):
    """Pass 1: im2col matmul (the conv) + per-tile BN partial statistics.

    p_ref:     (TM, KCP)  bf16  im2col patch tile
    w_ref:     (KCP, COP) bf16  reshaped/padded conv weight (same block every step)
    y_ref:     (TM, COP)  bf16  raw conv output tile (bf16 halves the HBM round trip)
    stats_ref: (8, COP)   f32   row 0 = per-channel sum, row 1 = per-channel sum-of-squares
                                (rows 2..7 are never read by the wrapper; left unwritten)
    """
    y = jnp.dot(p_ref[...], w_ref[...], preferred_element_type=jnp.float32)
    # Partial stats from the f32 MXU accumulator, before the bf16 store.
    stats_ref[0:1, :] = jnp.sum(y, axis=0, keepdims=True)
    stats_ref[1:2, :] = jnp.sum(y * y, axis=0, keepdims=True)
    y_ref[...] = y.astype(y_ref.dtype)


def bn_apply_nchw_kernel(y_ref, scale_ref, shift_ref, o_ref, *, relu, cout):
    """Pass 2: folded BN affine (y*scale + shift) + optional ReLU, emitted directly in NCHW.

    y_ref:     (TQ, COP)     bf16  conv output tile (rows = flat (h,w) of one image)
    scale_ref: (1, COP)      f32
    shift_ref: (1, COP)      f32
    o_ref:     (1, Cout, TQ) f32   NCHW output tile (lane-dense along TQ)
    """
    y = y_ref[...].astype(jnp.float32)        # all elementwise math in f32 (v5e-safe)
    o = y * scale_ref[...] + shift_ref[...]
    if relu:
        o = jnp.maximum(o, 0.0)
    # (TQ, COP) -> (COP, TQ): XLU transpose is idle slack in this elementwise pass and it
    # removes the full NHWC->NCHW transpose pass over HBM that the wrapper used to do.
    o_ref[0] = jnp.transpose(o)[:cout, :]


# ----------------------------------------------------------------------------- wrapper
def cnnblock_forward(x_nchw, conv_weight, bn_gamma, bn_beta, *,
                     kernel_size=3, stride=1, padding="same",
                     add_coord=True, activate_relu=True,
                     eps=BN_EPS, tile_m=512):
    """Matches CNNBlock.forward (AddCoords -> Conv2d bias=False -> BatchNorm2d(train) -> ReLU).

    x_nchw:      (N, Cin, H, W)                       PyTorch layout
    conv_weight: (Cout, Cin+2 if add_coord else Cin, KH, KW)
    bn_gamma:    (Cout,)
    bn_beta:     (Cout,)
    returns:     (N, Cout, H, W)
    """
    assert stride == 1, "only stride=1 supported"
    # TODO(synk): stride>1 and even kernel sizes (asymmetric 'same' padding) not implemented.
    if isinstance(kernel_size, (tuple, list)):
        KH, KW = kernel_size
    else:
        KH = KW = int(kernel_size)
    assert KH % 2 == 1 and KW % 2 == 1, "even kernel sizes not supported"

    N, Cin, H, W = x_nchw.shape
    Cout = conv_weight.shape[0]
    HW = H * W
    assert HW % 8 == 0, "H*W must be a multiple of 8"  # TODO(synk): pad spatial dim otherwise

    # ---- glue: NCHW -> NHWC (bf16), AddCoords (bf16), im2col (bf16) ----
    # Cast to bf16 BEFORE building the K^2-inflated patch array so the inflation happens in
    # bf16 (halves wrapper HBM traffic vs. f32 concat + trailing cast).
    x_nhwc = jnp.transpose(x_nchw, (0, 2, 3, 1)).astype(jnp.bfloat16)
    if add_coord:
        ii = (jnp.arange(H, dtype=jnp.float32) / max(H - 1, 1)) * 2.0 - 1.0   # H coordinate
        jj = (jnp.arange(W, dtype=jnp.float32) / max(W - 1, 1)) * 2.0 - 1.0   # W coordinate
        xx = jnp.broadcast_to(ii.astype(jnp.bfloat16)[:, None, None], (H, W, 1))
        yy = jnp.broadcast_to(jj.astype(jnp.bfloat16)[None, :, None], (H, W, 1))
        coords = jnp.broadcast_to(jnp.concatenate([xx, yy], axis=-1)[None], (N, H, W, 2))
        x_nhwc = jnp.concatenate([x_nhwc, coords], axis=-1)
    Cin_eff = x_nhwc.shape[-1]
    assert conv_weight.shape[1] == Cin_eff

    ph, pw = (KH - 1) // 2, (KW - 1) // 2
    xp = jnp.pad(x_nhwc, ((0, 0), (ph, ph), (pw, pw), (0, 0)))
    # TODO(synk): for large Cin move this im2col into the kernel (halo'd blocks) to avoid the
    # K^2 HBM read inflation; kept wrapper-side here because Cin_eff is tiny (review item 1).
    cols = [xp[:, dh:dh + H, dw:dw + W, :] for dh in range(KH) for dw in range(KW)]
    patches = jnp.concatenate(cols, axis=-1).reshape(N * HW, KH * KW * Cin_eff)

    # ---- pad to MXU / lane-friendly sizes (all bf16) ----
    M = N * HW
    KC = KH * KW * Cin_eff
    TM = min(tile_m, _round_up(M, 256))   # default 512: v5e/v6e want 512-1024, v7x 256-512
    MP = _round_up(M, TM)
    KCP = _round_up(KC, 128)              # lane-dense contraction
    COP = _round_up(Cout, 128)            # lane-dense output channels (unmasked stores)
    num_tiles = MP // TM
    vmem_limit = _vmem_limit_bytes()

    patches = jnp.pad(patches, ((0, MP - M), (0, KCP - KC)))
    w2 = jnp.transpose(conv_weight.astype(jnp.float32), (2, 3, 1, 0)).reshape(KC, Cout)
    w2 = jnp.pad(w2, ((0, KCP - KC), (0, COP - Cout))).astype(jnp.bfloat16)

    # ---- pass 1: conv (single MXU matmul per tile) + per-tile sum / sumsq ----
    # TODO(synk): add a K-reduction grid axis when KCP grows (wide Cin) to bound the per-step
    # VMEM footprint on v7x.
    conv_cost = pl.CostEstimate(
        flops=2 * MP * KCP * COP + 3 * MP * COP,
        transcendentals=0,
        bytes_accessed=MP * KCP * 2 + KCP * COP * 2 + MP * COP * 2 + num_tiles * 8 * COP * 4)
    y, stats = pl.pallas_call(
        conv_stats_kernel,
        out_shape=(jax.ShapeDtypeStruct((MP, COP), jnp.bfloat16),
                   jax.ShapeDtypeStruct((num_tiles * 8, COP), jnp.float32)),
        grid_spec=pltpu.PrefetchScalarGridSpec(
            num_scalar_prefetch=0,
            grid=(num_tiles,),
            in_specs=[pl.BlockSpec((TM, KCP), lambda i: (i, 0)),
                      # Invariant weight block (constant index map -> fetched once).
                      # TODO(synk): pipeline_mode=pl.Buffered(1) would also drop its second
                      # (double-buffer) VMEM copy on v7x; kept default for portability.
                      pl.BlockSpec((KCP, COP), lambda i: (0, 0))],
            out_specs=[pl.BlockSpec((TM, COP), lambda i: (i, 0)),
                       pl.BlockSpec((8, COP), lambda i: (i, 0))]),
        compiler_params=pltpu.CompilerParams(
            dimension_semantics=("parallel",),
            vmem_limit_bytes=vmem_limit),
        cost_estimate=conv_cost,
    )(patches, w2)

    # ---- global BN stats -> folded per-channel scale / shift (tiny f32 glue) ----
    st = stats.reshape(num_tiles, 8, COP)
    cnt = jnp.float32(M)  # zero-padded rows contribute exact zeros; divide by the true count
    mean = jnp.sum(st[:, 0, :], axis=0) / cnt
    # TODO(synk): E[y^2]-E[y]^2 can cancel when |mean| >> std; a two-pass variance would fix it.
    var = jnp.maximum(jnp.sum(st[:, 1, :], axis=0) / cnt - mean * mean, 0.0)
    gamma_p = jnp.pad(bn_gamma.astype(jnp.float32), (0, COP - Cout))
    beta_p = jnp.pad(bn_beta.astype(jnp.float32), (0, COP - Cout))
    scale_v = gamma_p * jax.lax.rsqrt(var + eps)
    shift_v = beta_p - mean * scale_v
    scale = scale_v.reshape(1, COP)
    shift = shift_v.reshape(1, COP)

    # ---- pass 2: normalize + ReLU, emitted directly as (N, Cout, H*W) ----
    # Large lane-dense spatial tile (decoupled from the matmul tile).
    TQ = HW
    if HW % 128 == 0:
        for cand in (4096, 2048, 1024, 512, 256, 128):
            if HW % cand == 0:
                TQ = cand
                break
    nq = HW // TQ
    apply_cost = pl.CostEstimate(
        flops=3 * M * COP, transcendentals=0,
        bytes_accessed=M * COP * 2 + N * Cout * HW * 4 + 2 * COP * 4)
    out3 = pl.pallas_call(
        functools.partial(bn_apply_nchw_kernel, relu=activate_relu, cout=Cout),
        out_shape=jax.ShapeDtypeStruct((N, Cout, HW), jnp.float32),
        grid_spec=pltpu.PrefetchScalarGridSpec(
            num_scalar_prefetch=0,
            grid=(N, nq),
            in_specs=[pl.BlockSpec((TQ, COP), lambda n, q: (n * nq + q, 0)),
                      pl.BlockSpec((1, COP), lambda n, q: (0, 0)),
                      pl.BlockSpec((1, COP), lambda n, q: (0, 0))],
            out_specs=pl.BlockSpec((1, Cout, TQ), lambda n, q: (n, 0, q))),
        compiler_params=pltpu.CompilerParams(
            dimension_semantics=("parallel", "parallel"),
            vmem_limit_bytes=vmem_limit),
        cost_estimate=apply_cost,
    )(y, scale, shift)

    # Free (contiguous) reshape back to PyTorch NCHW; no extra slice/transpose HBM pass.
    return out3.reshape(N, Cout, H, W)


# ----------------------------------------------------------------------------- reference
def _reference(x_nchw, conv_w, gamma, beta, eps):
    """Pure-JAX reference mirroring the kernel's bf16 choices (MXU operands and y store)."""
    N, _, H, W = x_nchw.shape
    ii = (jnp.arange(H, dtype=jnp.float32) / max(H - 1, 1)) * 2.0 - 1.0
    jj = (jnp.arange(W, dtype=jnp.float32) / max(W - 1, 1)) * 2.0 - 1.0
    xx = jnp.broadcast_to(ii[None, None, :, None], (N, 1, H, W))
    yy = jnp.broadcast_to(jj[None, None, None, :], (N, 1, H, W))
    xc = jnp.concatenate([x_nchw.astype(jnp.float32), xx, yy], axis=1)
    xc = xc.astype(jnp.bfloat16).astype(jnp.float32)
    wr = conv_w.astype(jnp.bfloat16).astype(jnp.float32)
    y = jax.lax.conv_general_dilated(
        xc, wr, window_strides=(1, 1), padding="SAME",
        dimension_numbers=("NCHW", "OIHW", "NCHW"),
        precision=jax.lax.Precision.HIGHEST)
    mean = jnp.mean(y, axis=(0, 2, 3), keepdims=True)           # BN stats from f32 conv out
    var = jnp.mean((y - mean) ** 2, axis=(0, 2, 3), keepdims=True)
    yq = y.astype(jnp.bfloat16).astype(jnp.float32)              # mirror the bf16 y round trip
    yn = (yq - mean) * jax.lax.rsqrt(var + eps)
    yn = yn * gamma[None, :, None, None] + beta[None, :, None, None]
    return jnp.maximum(yn, 0.0)


if __name__ == "__main__":
    # CNNBlock(in_channels=4, out_channels=8, kernel_size=3, stride=1, padding='same',
    #          activate_relu=True, bias=False, add_coord=True)
    N, Cin, H, W = 2, 4, 16, 16
    Cout, K = 8, 3
    cin_eff = Cin + 2  # AddCoords appends 2 coordinate channels

    key = jax.random.PRNGKey(0)
    kx, kw = jax.random.split(key)
    x = jax.random.normal(kx, (N, Cin, H, W), dtype=jnp.float32)

    # Deterministic Conv2d weight init (kaiming-uniform-like bound); BN affine defaults.
    bound = 1.0 / np.sqrt(cin_eff * K * K)
    conv_w = jax.random.uniform(kw, (Cout, cin_eff, K, K),
                                minval=-bound, maxval=bound, dtype=jnp.float32)
    gamma = jnp.ones((Cout,), jnp.float32)
    beta = jnp.zeros((Cout,), jnp.float32)

    ref = jax.block_until_ready(_reference(x, conv_w, gamma, beta, BN_EPS))

    # Default (large-tile) config and a smaller-tile config that exercises the multi-tile
    # BN-stats reduction path.
    for tm in (512, 256):
        out = cnnblock_forward(x, conv_w, gamma, beta, kernel_size=K, stride=1,
                               add_coord=True, activate_relu=True, tile_m=tm)
        out = jax.block_until_ready(out)
        np.testing.assert_allclose(np.asarray(out), np.asarray(ref), rtol=2e-2, atol=2e-2)

    print("KERNEL_OK")
</pallas_src>

<mosaic_0001>
module attributes {stable_mosaic.version = 11 : i64} {
  func.func @conv_stats_kernel(%arg0: i32, %arg1: memref<512x128xbf16, #tpu.memory_space<vmem>>, %arg2: memref<128x128xbf16, #tpu.memory_space<vmem>>, %arg3: memref<512x128xbf16, #tpu.memory_space<vmem>>, %arg4: memref<8x128xf32, #tpu.memory_space<vmem>>) attributes {dimension_semantics = [#tpu.dimension_semantics<parallel>], iteration_bounds = array<i64: 1>, scalar_prefetch = 0 : i64, scratch_operands = 0 : i64, tpu.core_type = #tpu.core_type<tc>, window_params = [{transform_indices = @transform_0, window_bounds = array<i64: 512, 128>}, {pipeline_mode = #tpu.pipeline_mode<synchronous>, transform_indices = @transform_1, window_bounds = array<i64: 128, 128>}, {transform_indices = @transform_2, window_bounds = array<i64: 512, 128>}, {transform_indices = @transform_3, window_bounds = array<i64: 8, 128>}]} {
    %c0 = arith.constant 0 : index
    %c0_0 = arith.constant 0 : index
    %0 = vector.load %arg1[%c0, %c0_0] : memref<512x128xbf16, #tpu.memory_space<vmem>>, vector<512x128xbf16>
    %c0_1 = arith.constant 0 : index
    %c0_2 = arith.constant 0 : index
    %1 = vector.load %arg2[%c0_1, %c0_2] : memref<128x128xbf16, #tpu.memory_space<vmem>>, vector<128x128xbf16>
    %cst = arith.constant dense<0.000000e+00> : vector<512x128xf32>
    %2 = tpu.matmul %0, %1, %cst {dimension_numbers = #tpu.dot_dimension_numbers<[1], [0], [0], [1], [0, 0, 1, 1], [], []>} : vector<512x128xbf16>, vector<128x128xbf16>, vector<512x128xf32> -> vector<512x128xf32>
    %cst_3 = arith.constant dense<0.000000e+00> : vector<128xf32>
    %3 = vector.multi_reduction <add>, %2, %cst_3 [0] : vector<512x128xf32> to vector<128xf32>
    %4 = vector.shape_cast %3 : vector<128xf32> to vector<1x128xf32>
    %c0_4 = arith.constant 0 : index
    %c0_5 = arith.constant 0 : index
    %5 = vector.load %arg4[%c0_4, %c0_5] : memref<8x128xf32, #tpu.memory_space<vmem>>, vector<1x128xf32>
    tpu.vector_store %arg4[%c0_4, %c0_5], %4 {strides = array<i32>} : memref<8x128xf32, #tpu.memory_space<vmem>>, vector<1x128xf32>,
    %6 = arith.mulf %2, %2 : vector<512x128xf32>
    %cst_6 = arith.constant dense<0.000000e+00> : vector<128xf32>
    %7 = vector.multi_reduction <add>, %6, %cst_6 [0] : vector<512x128xf32> to vector<128xf32>
    %8 = vector.shape_cast %7 : vector<128xf32> to vector<1x128xf32>
    %c1 = arith.constant 1 : index
    %c0_7 = arith.constant 0 : index
    %9 = vector.load %arg4[%c1, %c0_7] : memref<8x128xf32, #tpu.memory_space<vmem>>, vector<1x128xf32>
    tpu.vector_store %arg4[%c1, %c0_7], %8 {strides = array<i32>} : memref<8x128xf32, #tpu.memory_space<vmem>>, vector<1x128xf32>,
    %10 = arith.truncf %2 : vector<512x128xf32> to vector<512x128xbf16>
    %c0_8 = arith.constant 0 : index
    %c0_9 = arith.constant 0 : index
    %11 = vector.load %arg3[%c0_8, %c0_9] : memref<512x128xbf16, #tpu.memory_space<vmem>>, vector<512x128xbf16>
    tpu.vector_store %arg3[%c0_8, %c0_9], %10 {strides = array<i32>} : memref<512x128xbf16, #tpu.memory_space<vmem>>, vector<512x128xbf16>,
    return
  }
  func.func @transform_0(%arg0: i32) -> (i32, i32) {
    %c0_i32 = arith.constant 0 : i32
    %c0_i32_0 = arith.constant 0 : i32
    return %arg0, %c0_i32 : i32, i32
  }
  func.func @transform_1(%arg0: i32) -> (i32, i32) {
    %c0_i32 = arith.constant 0 : i32
    %c0_i32_0 = arith.constant 0 : i32
    %c0_i32_1 = arith.constant 0 : i32
    return %c0_i32, %c0_i32_0 : i32, i32
  }
  func.func @transform_2(%arg0: i32) -> (i32, i32) {
    %c0_i32 = arith.constant 0 : i32
    %c0_i32_0 = arith.constant 0 : i32
    return %arg0, %c0_i32 : i32, i32
  }
  func.func @transform_3(%arg0: i32) -> (i32, i32) {
    %c0_i32 = arith.constant 0 : i32
    %c0_i32_0 = arith.constant 0 : i32
    return %arg0, %c0_i32 : i32, i32
  }
}

</mosaic_0001>

<llo_original>
// kernel: tpu_custom_call.1
$region0: #{tpu_custom_call.1}
  #allocation0 [shape = 'u32[]', space=smem, size = 0x4, offset = 0x4, fixed_abs, tag = 'smem constant byte address 0x4 - core index']
  #allocation1 [shape = 'u32[144,128]{1,0:T(1,128)}', space=vmem, size = 0x12000, scoped, tag = 'internal scratch']
  %s0 = inlined_call_operand.hbm [shape: bf16[512,128], index: 0, kind: input, shape index: {}]
  %s1 = inlined_call_operand.hbm [shape: bf16[128,128], index: 1, kind: input, shape index: {}]
  %s2 = inlined_call_operand.hbm [shape: bf16[512,128], index: 2, kind: output, shape index: {0}]
  %s3 = inlined_call_operand.hbm [shape: f32[8,128], index: 3, kind: output, shape index: {1}]
  %4 = xla_tuple %s2, %s3
  %s5 = sld [smem:[#allocation0]]
  $region34: #{tpu_custom_call.1} parent=0
    _
  %s7 = ssub.s32 1, %s5
  %s8 = scalar_select 0, %s7, %s5
  $region1: #{tpu_custom_call.1} parent=0
    #allocation2 [shape = 'u8[131072]{0}', space=vmem, size = 0x20000, scoped, tag = 'input window, operand 0, single buffered']
    #allocation3 [shape = 's32[1]{0}', space=sflag, size = 0x4, scoped, tag = 'scoped memory for tpu_custom_call.1']
    #allocation4 [shape = 's32[1]{0}', space=sflag, size = 0x4, scoped, tag = 'scoped memory for tpu_custom_call.1']
    #allocation5 [shape = 'u8[32768]{0}', space=vmem, size = 0x8000, scoped, tag = 'input window, operand 1, single buffered']
    #allocation6 [shape = 's32[1]{0}', space=sflag, size = 0x4, scoped, tag = 'scoped memory for tpu_custom_call.1']
    #allocation7 [shape = 'u8[131072]{0}', space=vmem, size = 0x20000, scoped, tag = 'output window, operand 0, single buffered']
    #allocation8 [shape = 'u8[4096]{0}', space=vmem, size = 0x1000, scoped, tag = 'output window, operand 1, single buffered']
    #allocation9 [shape = 's32[1]{0}', space=sflag, size = 0x4, scoped, tag = 'scoped memory for tpu_custom_call.1']
    %9 = vsyncpa [#allocation3], 0
    %10 = vsyncpa [#allocation6], 0
    %11 = vsyncpa [#allocation4], 0
    %12 = vsyncpa [#allocation9], 0
    // Predicated region
    $region2: #{tpu_custom_call.1} parent=1 // pred_check
      _
    $region3: #{tpu_custom_call.1} parent=1 // pred_check_branch
      %14 = sbr.rel (0) target = $region5
    $region4: #{tpu_custom_call.1} parent=1 // pred_region
      %s16 = ssub.s32 4096, 4096
      %17 = vsyncadd [#allocation3], %s16
      %s18 = sshll.u32 [#allocation2], 4
      %s19 = int_to_ptr.vmem [resolvable:$true] %s18
      %24 = dma.hbm_to_vmem [thread:$0]  %s0, 4096, %s19, [#allocation3], 64, 64, 4
    $region5: #{tpu_custom_call.1} parent=1 // pred_fallthru
      _
    // Predicated region
    $region6: #{tpu_custom_call.1} parent=1 // pred_check
      _
    $region7: #{tpu_custom_call.1} parent=1 // pred_check_branch
      %26 = sbr.rel (0) target = $region9
    $region8: #{tpu_custom_call.1} parent=1 // pred_region
      %s28 = ssub.s32 1024, 1024
      %29 = vsyncadd [#allocation6], %s28
      %s30 = sshll.u32 [#allocation5], 4
      %s31 = int_to_ptr.vmem [resolvable:$true] %s30
      %36 = dma.hbm_to_vmem [thread:$0]  %s1, 1024, %s31, [#allocation6], 64, 64, 4
    $region9: #{tpu_custom_call.1} parent=1 // pred_fallthru
      _
    // Predicated region
    $region10: #{tpu_custom_call.1} parent=1 // pred_check
      _
    $region11: #{tpu_custom_call.1} parent=1 // pred_check_branch
      %38 = sbr.rel (0) target = $region13
    $region12: #{tpu_custom_call.1} parent=1 // pred_region
      %39 = dma.done [#allocation3], 4096
    $region13: #{tpu_custom_call.1} parent=1 // pred_fallthru
      _
    // Predicated region
    $region14: #{tpu_custom_call.1} parent=1 // pred_check
      _
    $region15: #{tpu_custom_call.1} parent=1 // pred_check_branch
      %41 = sbr.rel (0) target = $region17
    $region16: #{tpu_custom_call.1} parent=1 // pred_region
      %42 = dma.done [#allocation6], 1024
    $region17: #{tpu_custom_call.1} parent=1 // pred_fallthru
      _
    %v44 = vld [vmem:[#allocation2] sm:$0xf]
    %v45 = vld [vmem:[#allocation2 + $0x4] sm:$0xf]
    %v46 = vld [vmem:[#allocation2 + $0x8] sm:$0xf]
    %v47 = vld [vmem:[#allocation2 + $0xc] sm:$0xf]
    %v48 = vld [vmem:[#allocation2 + $0x10] sm:$0xf]
    %v49 = vld [vmem:[#allocation2 + $0x14] sm:$0xf]
    %v50 = vld [vmem:[#allocation2 + $0x18] sm:$0xf]
    %v51 = vld [vmem:[#allocation2 + $0x1c] sm:$0xf]
    %v52 = vld [vmem:[#allocation2 + $0x20] sm:$0xf]
    %v53 = vld [vmem:[#allocation2 + $0x24] sm:$0xf]
    %v54 = vld [vmem:[#allocation2 + $0x28] sm:$0xf]
    %v55 = vld [vmem:[#allocation2 + $0x2c] sm:$0xf]
    %v56 = vld [vmem:[#allocation2 + $0x30] sm:$0xf]
    %v57 = vld [vmem:[#allocation2 + $0x34] sm:$0xf]
    %v58 = vld [vmem:[#allocation2 + $0x38] sm:$0xf]
    %v59 = vld [vmem:[#allocation2 + $0x3c] sm:$0xf]
    %v60 = vld [vmem:[#allocation2 + $0x40] sm:$0xf]
    %v61 = vld [vmem:[#allocation2 + $0x44] sm:$0xf]
    %v62 = vld [vmem:[#allocation2 + $0x48] sm:$0xf]
    %v63 = vld [vmem:[#allocation2 + $0x4c] sm:$0xf]
    %v64 = vld [vmem:[#allocation2 + $0x50] sm:$0xf]
    %v65 = vld [vmem:[#allocation2 + $0x54] sm:$0xf]
    %v66 = vld [vmem:[#allocation2 + $0x58] sm:$0xf]
    %v67 = vld [vmem:[#allocation2 + $0x5c] sm:$0xf]
    %v68 = vld [vmem:[#allocation2 + $0x60] sm:$0xf]
    %v69 = vld [vmem:[#allocation2 + $0x64] sm:$0xf]
    %v70 = vld [vmem:[#allocation2 + $0x68] sm:$0xf]
    %v71 = vld [vmem:[#allocation2 + $0x6c] sm:$0xf]
    %v72 = vld [vmem:[#allocation2 + $0x70] sm:$0xf]
    %v73 = vld [vmem:[#allocation2 + $0x74] sm:$0xf]
    %v74 = vld [vmem:[#allocation2 + $0x78] sm:$0xf]
    %v75 = vld [vmem:[#allocation2 + $0x7c] sm:$0xf]
    %v76 = vld [vmem:[#allocation2 + $0x80] sm:$0xf]
    %v77 = vld [vmem:[#allocation2 + $0x84] sm:$0xf]
    %v78 = vld [vmem:[#allocation2 + $0x88] sm:$0xf]
    %v79 = vld [vmem:[#allocation2 + $0x8c] sm:$0xf]
    %v80 = vld [vmem:[#allocation2 + $0x90] sm:$0xf]
    %v81 = vld [vmem:[#allocation2 + $0x94] sm:$0xf]
    %v82 = vld [vmem:[#allocation2 + $0x98] sm:$0xf]
    %v83 = vld [vmem:[#allocation2 + $0x9c] sm:$0xf]
    %v84 = vld [vmem:[#allocation2 + $0xa0] sm:$0xf]
    %v85 = vld [vmem:[#allocation2 + $0xa4] sm:$0xf]
    %v86 = vld [vmem:[#allocation2 + $0xa8] sm:$0xf]
    %v87 = vld [vmem:[#allocation2 + $0xac] sm:$0xf]
    %v88 = vld [vmem:[#allocation2 + $0xb0] sm:$0xf]
    %v89 = vld [vmem:[#allocation2 + $0xb4] sm:$0xf]
    %v90 = vld [vmem:[#allocation2 + $0xb8] sm:$0xf]
    %v91 = vld [vmem:[#allocation2 + $0xbc] sm:$0xf]
    %v92 = vld [vmem:[#allocation2 + $0xc0] sm:$0xf]
    %v93 = vld [vmem:[#allocation2 + $0xc4] sm:$0xf]
    %v94 = vld [vmem:[#allocation2 + $0xc8] sm:$0xf]
    %v95 = vld [vmem:[#allocation2 + $0xcc] sm:$0xf]
    %v96 = vld [vmem:[#allocation2 + $0xd0] sm:$0xf]
    %v97 = vld [vmem:[#allocation2 + $0xd4] sm:$0xf]
    %v98 = vld [vmem:[#allocation2 + $0xd8] sm:$0xf]
    %v99 = vld [vmem:[#allocation2 + $0xdc] sm:$0xf]
    %v100 = vld [vmem:[#allocation2 + $0xe0] sm:$0xf]
    %v101 = vld [vmem:[#allocation2 + $0xe4] sm:$0xf]
    %v102 = vld [vmem:[#allocation2 + $0xe8] sm:$0xf]
    %v103 = vld [vmem:[#allocation2 + $0xec] sm:$0xf]
    %v104 = vld [vmem:[#allocation2 + $0xf0] sm:$0xf]
    %v105 = vld [vmem:[#allocation2 + $0xf4] sm:$0xf]
    %v106 = vld [vmem:[#allocation2 + $0xf8] sm:$0xf]
    %v107 = vld [vmem:[#allocation2 + $0xfc] sm:$0xf]
    %v108 = vld [vmem:[#allocation5] sm:$0xf]
    %v109 = vld [vmem:[#allocation5 + $0x4] sm:$0xf]
    %v110 = vld [vmem:[#allocation5 + $0x8] sm:$0xf]
    %v111 = vld [vmem:[#allocation5 + $0xc] sm:$0xf]
    %v112 = vld [vmem:[#allocation5 + $0x10] sm:$0xf]
    %v113 = vld [vmem:[#allocation5 + $0x14] sm:$0xf]
    %v114 = vld [vmem:[#allocation5 + $0x18] sm:$0xf]
    %v115 = vld [vmem:[#allocation5 + $0x1c] sm:$0xf]
    %v116 = vld [vmem:[#allocation5 + $0x20] sm:$0xf]
    %v117 = vld [vmem:[#allocation5 + $0x24] sm:$0xf]
    %v118 = vld [vmem:[#allocation5 + $0x28] sm:$0xf]
    %v119 = vld [vmem:[#allocation5 + $0x2c] sm:$0xf]
    %v120 = vld [vmem:[#allocation5 + $0x30] sm:$0xf]
    %v121 = vld [vmem:[#allocation5 + $0x34] sm:$0xf]
    %v122 = vld [vmem:[#allocation5 + $0x38] sm:$0xf]
    %v123 = vld [vmem:[#allocation5 + $0x3c] sm:$0xf]
    %v188 = vunpack.c.l.b16 %v44
    %v189 = vunpack.c.l.b16 %v45
    %v190 = vunpack.c.l.b16 %v46
    %v191 = vunpack.c.l.b16 %v47
    %v192 = vunpack.c.l.b16 %v48
    %v193 = vunpack.c.l.b16 %v49
    %v194 = vunpack.c.l.b16 %v50
    %v195 = vunpack.c.l.b16 %v51
    %v196 = vunpack.c.l.b16 %v52
    %v197 = vunpack.c.l.b16 %v53
    %v198 = vunpack.c.l.b16 %v54
    %v199 = vunpack.c.l.b16 %v55
    %v200 = vunpack.c.l.b16 %v56
    %v201 = vunpack.c.l.b16 %v57
    %v202 = vunpack.c.l.b16 %v58
    %v203 = vunpack.c.l.b16 %v59
    %v204 = vunpack.c.l.b16 %v60
    %v205 = vunpack.c.l.b16 %v61
    %v206 = vunpack.c.l.b16 %v62
    %v207 = vunpack.c.l.b16 %v63
    %v208 = vunpack.c.l.b16 %v64
    %v209 = vunpack.c.l.b16 %v65
    %v210 = vunpack.c.l.b16 %v66
    %v211 = vunpack.c.l.b16 %v67
    %v212 = vunpack.c.l.b16 %v68
    %v213 = vunpack.c.l.b16 %v69
    %v214 = vunpack.c.l.b16 %v70
    %v215 = vunpack.c.l.b16 %v71
    %v216 = vunpack.c.l.b16 %v72
    %v217 = vunpack.c.l.b16 %v73
    %v218 = vunpack.c.l.b16 %v74
    %v219 = vunpack.c.l.b16 %v75
    %v220 = vunpack.c.l.b16 %v76
    %v221 = vunpack.c.l.b16 %v77
    %v222 = vunpack.c.l.b16 %v78
    %v223 = vunpack.c.l.b16 %v79
    %v224 = vunpack.c.l.b16 %v80
    %v225 = vunpack.c.l.b16 %v81
    %v226 = vunpack.c.l.b16 %v82
    %v227 = vunpack.c.l.b16 %v83
    %v228 = vunpack.c.l.b16 %v84
    %v229 = vunpack.c.l.b16 %v85
    %v230 = vunpack.c.l.b16 %v86
    %v231 = vunpack.c.l.b16 %v87
    %v232 = vunpack.c.l.b16 %v88
    %v233 = vunpack.c.l.b16 %v89
    %v234 = vunpack.c.l.b16 %v90
    %v235 = vunpack.c.l.b16 %v91
    %v236 = vunpack.c.l.b16 %v92
    %v237 = vunpack.c.l.b16 %v93
    %v238 = vunpack.c.l.b16 %v94
    %v239 = vunpack.c.l.b16 %v95
    %v240 = vunpack.c.l.b16 %v96
    %v241 = vunpack.c.l.b16 %v97
    %v242 = vunpack.c.l.b16 %v98
    %v243 = vunpack.c.l.b16 %v99
    %v244 = vunpack.c.l.b16 %v100
    %v245 = vunpack.c.l.b16 %v101
    %v246 = vunpack.c.l.b16 %v102
    %v247 = vunpack.c.l.b16 %v103
    %v248 = vunpack.c.l.b16 %v104
    %v249 = vunpack.c.l.b16 %v105
    %v250 = vunpack.c.l.b16 %v106
    %v251 = vunpack.c.l.b16 %v107
    %v252 = vpack.c.b16 %v189, %v188
    %v253 = vpack.c.b16 %v191, %v190
    %v254 = vpack.c.b16 %v193, %v192
    %v255 = vpack.c.b16 %v195, %v194
    %v256 = vpack.c.b16 %v197, %v196
    %v257 = vpack.c.b16 %v199, %v198
    %v258 = vpack.c.b16 %v201, %v200
    %v259 = vpack.c.b16 %v203, %v202
    %v260 = vpack.c.b16 %v205, %v204
    %v261 = vpack.c.b16 %v207, %v206
    %v262 = vpack.c.b16 %v209, %v208
    %v263 = vpack.c.b16 %v211, %v210
    %v264 = vpack.c.b16 %v213, %v212
    %v265 = vpack.c.b16 %v215, %v214
    %v266 = vpack.c.b16 %v217, %v216
    %v267 = vpack.c.b16 %v219, %v218
    %v268 = vpack.c.b16 %v221, %v220
    %v269 = vpack.c.b16 %v223, %v222
    %v270 = vpack.c.b16 %v225, %v224
    %v271 = vpack.c.b16 %v227, %v226
    %v272 = vpack.c.b16 %v229, %v228
    %v273 = vpack.c.b16 %v231, %v230
    %v274 = vpack.c.b16 %v233, %v232
    %v275 = vpack.c.b16 %v235, %v234
    %v276 = vpack.c.b16 %v237, %v236
    %v277 = vpack.c.b16 %v239, %v238
    %v278 = vpack.c.b16 %v241, %v240
    %v279 = vpack.c.b16 %v243, %v242
    %v280 = vpack.c.b16 %v245, %v244
    %v281 = vpack.c.b16 %v247, %v246
    %v282 = vpack.c.b16 %v249, %v248
    %v283 = vpack.c.b16 %v251, %v250
    %v332 = vunpack.c.l.b16 %v108
    %v333 = vunpack.c.l.b16 %v109
    %v334 = vunpack.c.l.b16 %v110
    %v335 = vunpack.c.l.b16 %v111
    %v336 = vunpack.c.l.b16 %v112
    %v337 = vunpack.c.l.b16 %v113
    %v338 = vunpack.c.l.b16 %v114
    %v339 = vunpack.c.l.b16 %v115
    %v340 = vunpack.c.l.b16 %v116
    %v341 = vunpack.c.l.b16 %v117
    %v342 = vunpack.c.l.b16 %v118
    %v343 = vunpack.c.l.b16 %v119
    %v344 = vunpack.c.l.b16 %v120
    %v345 = vunpack.c.l.b16 %v121
    %v346 = vunpack.c.l.b16 %v122
    %v347 = vunpack.c.l.b16 %v123
    %v348 = vpack.c.b16 %v333, %v332
    %v349 = vpack.c.b16 %v335, %v334
    %v350 = vpack.c.b16 %v337, %v336
    %v351 = vpack.c.b16 %v339, %v338
    %v352 = vpack.c.b16 %v341, %v340
    %v353 = vpack.c.b16 %v343, %v342
    %v354 = vpack.c.b16 %v345, %v344
    %v355 = vpack.c.b16 %v347, %v346
    %364 = vmatprep.subr.bf16.mxu0 0
    %365 = vmatpush1.bf16.msra.mxu0 %v348
    %366 = vmatprep.subr.bf16.mxu0 0
    %367 = vmatpush1.bf16.msra.mxu0 %v349
    %368 = vmatprep.subr.bf16.mxu0 0
    %369 = vmatpush1.bf16.msra.mxu0 %v350
    %370 = vmatprep.subr.bf16.mxu0 0
    %371 = vmatpush1.bf16.msra.mxu0 %v351
    %372 = vmatprep.subr.bf16.mxu0 0
    %373 = vmatpush1.bf16.msra.mxu0 %v352
    %374 = vmatprep.subr.bf16.mxu0 0
    %375 = vmatpush1.bf16.msra.mxu0 %v353
    %376 = vmatprep.subr.bf16.mxu0 0
    %377 = vmatpush1.bf16.msra.mxu0 %v354
    %378 = vmatprep.subr.bf16.mxu0 0
    %379 = vmatpush1.bf16.msra.mxu0 %v355
    %380 = vmatprep.subr.bf16.mxu0 0
    %381 = vmatpush1.bf16.msra.mxu0 0
    %382 = vmatprep.subr.bf16.mxu0 0
    %383 = vmatpush1.bf16.msra.mxu0 0
    %384 = vmatprep.subr.bf16.mxu0 0
    %385 = vmatpush1.bf16.msra.mxu0 0
    %386 = vmatprep.subr.bf16.mxu0 0
    %387 = vmatpush1.bf16.msra.mxu0 0
    %388 = vmatprep.subr.bf16.mxu0 0
    %389 = vmatpush1.bf16.msra.mxu0 0
    %390 = vmatprep.subr.bf16.mxu0 0
    %391 = vmatpush1.bf16.msra.mxu0 0
    %392 = vmatprep.subr.bf16.mxu0 0
    %393 = vmatpush1.bf16.msra.mxu0 0
    %394 = vmatprep.subr.bf16.mxu0 0
    %395 = vmatpush1.bf16.msra.mxu0 0
    %396 = vmatprep.mubr.bf16.mxu0 0
    %397 = vmatmul.mubr.bf16.gmra.mrb[0].mxu0 %v252
    %v398 = vpop.f32.mrb[0].mxu0
    %v399 = vadd.f32 0.0, %v398
    %v400 = vpop.f32.mrb[0].mxu0
    %v401 = vpop.f32.mrb[0].mxu0
    %v402 = vadd.f32 0.0, %v401
    %v403 = vpop.f32.mrb[0].mxu0
    %404 = vmatprep.mubr.bf16.mxu0 0
    %405 = vmatmul.mubr.bf16.gmra.mrb[0].mxu0 %v253
    %v406 = vpop.f32.mrb[0].mxu0
    %v407 = vadd.f32 0.0, %v406
    %v408 = vpop.f32.mrb[0].mxu0
    %v409 = vpop.f32.mrb[0].mxu0
    %v410 = vadd.f32 0.0, %v409
    %v411 = vpop.f32.mrb[0].mxu0
    %412 = vmatprep.mubr.bf16.mxu0 0
    %413 = vmatmul.mubr.bf16.gmra.mrb[0].mxu0 %v254
    %v414 = vpop.f32.mrb[0].mxu0
    %v415 = vadd.f32 0.0, %v414
    %v416 = vpop.f32.mrb[0].mxu0
    %v417 = vpop.f32.mrb[0].mxu0
    %v418 = vadd.f32 0.0, %v417
    %v419 = vpop.f32.mrb[0].mxu0
    %420 = vmatprep.mubr.bf16.mxu0 0
    %421 = vmatmul.mubr.bf16.gmra.mrb[0].mxu0 %v255
    %v422 = vpop.f32.mrb[0].mxu0
    %v423 = vadd.f32 0.0, %v422
    %v424 = vpop.f32.mrb[0].mxu0
    %v425 = vpop.f32.mrb[0].mxu0
    %v426 = vadd.f32 0.0, %v425
    %v427 = vpop.f32.mrb[0].mxu0
    %428 = vmatprep.mubr.bf16.mxu0 0
    %429 = vmatmul.mubr.bf16.gmra.mrb[0].mxu0 %v256
    %v430 = vpop.f32.mrb[0].mxu0
    %v431 = vadd.f32 0.0, %v430
    %v432 = vpop.f32.mrb[0].mxu0
    %v433 = vpop.f32.mrb[0].mxu0
    %v434 = vadd.f32 0.0, %v433
    %v435 = vpop.f32.mrb[0].mxu0
    %436 = vmatprep.mubr.bf16.mxu0 0
    %437 = vmatmul.mubr.bf16.gmra.mrb[0].mxu0 %v257
    %v438 = vpop.f32.mrb[0].mxu0
    %v439 = vadd.f32 0.0, %v438
    %v440 = vpop.f32.mrb[0].mxu0
    %v441 = vpop.f32.mrb[0].mxu0
    %v442 = vadd.f32 0.0, %v441
    %v443 = vpop.f32.mrb[0].mxu0
    %444 = vmatprep.mubr.bf16.mxu0 0
    %445 = vmatmul.mubr.bf16.gmra.mrb[0].mxu0 %v258
    %v446 = vpop.f32.mrb[0].mxu0
    %v447 = vadd.f32 0.0, %v446
    %v448 = vpop.f32.mrb[0].mxu0
    %v449 = vpop.f32.mrb[0].mxu0
    %v450 = vadd.f32 0.0, %v449
    %v451 = vpop.f32.mrb[0].mxu0
    %452 = vmatprep.mubr.bf16.mxu0 0
    %453 = vmatmul.mubr.bf16.gmra.mrb[0].mxu0 %v259
    %v454 = vpop.f32.mrb[0].mxu0
    %v455 = vadd.f32 0.0, %v454
    %v456 = vpop.f32.mrb[0].mxu0
    %v457 = vpop.f32.mrb[0].mxu0
    %v458 = vadd.f32 0.0, %v457
    %v459 = vpop.f32.mrb[0].mxu0
    %460 = vmatprep.mubr.bf16.mxu0 0
    %461 = vmatmul.mubr.bf16.gmra.mrb[0].mxu0 %v260
    %v462 = vpop.f32.mrb[0].mxu0
    %v463 = vadd.f32 0.0, %v462
    %v464 = vpop.f32.mrb[0].mxu0
    %v465 = vpop.f32.mrb[0].mxu0
    %v466 = vadd.f32 0.0, %v465
    %v467 = vpop.f32.mrb[0].mxu0
    %468 = vmatprep.mubr.bf16.mxu0 0
    %469 = vmatmul.mubr.bf16.gmra.mrb[0].mxu0 %v261
    %v470 = vpop.f32.mrb[0].mxu0
    %v471 = vadd.f32 0.0, %v470
    %v472 = vpop.f32.mrb[0].mxu0
    %v473 = vpop.f32.mrb[0].mxu0
    %v474 = vadd.f32 0.0, %v473
    %v475 = vpop.f32.mrb[0].mxu0
    %476 = vmatprep.mubr.bf16.mxu0 0
    %477 = vmatmul.mubr.bf16.gmra.mrb[0].mxu0 %v262
    %v478 = vpop.f32.mrb[0].mxu0
    %v479 = vadd.f32 0.0, %v478
    %v480 = vpop.f32.mrb[0].mxu0
    %v481 = vpop.f32.mrb[0].mxu0
    %v482 = vadd.f32 0.0, %v481
    %v483 = vpop.f32.mrb[0].mxu0
    %484 = vmatprep.mubr.bf16.mxu0 0
    %485 = vmatmul.mubr.bf16.gmra.mrb[0].mxu0 %v263
    %v486 = vpop.f32.mrb[0].mxu0
    %v487 = vadd.f32 0.0, %v486
    %v488 = vpop.f32.mrb[0].mxu0
    %v489 = vpop.f32.mrb[0].mxu0
    %v490 = vadd.f32 0.0, %v489
    %v491 = vpop.f32.mrb[0].mxu0
    %492 = vmatprep.mubr.bf16.mxu0 0
    %493 = vmatmul.mubr.bf16.gmra.mrb[0].mxu0 %v264
    %v494 = vpop.f32.mrb[0].mxu0
    %v495 = vadd.f32 0.0, %v494
    %v496 = vpop.f32.mrb[0].mxu0
    %v497 = vpop.f32.mrb[0].mxu0
    %v498 = vadd.f32 0.0, %v497
    %v499 = vpop.f32.mrb[0].mxu0
    %500 = vmatprep.mubr.bf16.mxu0 0
    %501 = vmatmul.mubr.bf16.gmra.mrb[0].mxu0 %v265
    %v502 = vpop.f32.mrb[0].mxu0
    %v503 = vadd.f32 0.0, %v502
    %v504 = vpop.f32.mrb[0].mxu0
    %v505 = vpop.f32.mrb[0].mxu0
    %v506 = vadd.f32 0.0, %v505
    %v507 = vpop.f32.mrb[0].mxu0
    %508 = vmatprep.mubr.bf16.mxu0 0
    %509 = vmatmul.mubr.bf16.gmra.mrb[0].mxu0 %v266
    %v510 = vpop.f32.mrb[0].mxu0
    %v511 = vadd.f32 0.0, %v510
    %v512 = vpop.f32.mrb[0].mxu0
    %v513 = vpop.f32.mrb[0].mxu0
    %v514 = vadd.f32 0.0, %v513
    %v515 = vpop.f32.mrb[0].mxu0
    %516 = vmatprep.mubr.bf16.mxu0 0
    %517 = vmatmul.mubr.bf16.gmra.mrb[0].mxu0 %v267
    %v518 = vpop.f32.mrb[0].mxu0
    %v519 = vadd.f32 0.0, %v518
    %v520 = vpop.f32.mrb[0].mxu0
    %v521 = vpop.f32.mrb[0].mxu0
    %v522 = vadd.f32 0.0, %v521
    %v523 = vpop.f32.mrb[0].mxu0
    %524 = vmatprep.mubr.bf16.mxu0 0
    %525 = vmatmul.mubr.bf16.gmra.mrb[0].mxu0 %v268
    %v526 = vpop.f32.mrb[0].mxu0
    %v527 = vadd.f32 0.0, %v526
    %v528 = vpop.f32.mrb[0].mxu0
    %v529 = vpop.f32.mrb[0].mxu0
    %v530 = vadd.f32 0.0, %v529
    %v531 = vpop.f32.mrb[0].mxu0
    %532 = vmatprep.mubr.bf16.mxu0 0
    %533 = vmatmul.mubr.bf16.gmra.mrb[0].mxu0 %v269
    %v534 = vpop.f32.mrb[0].mxu0
    %v535 = vadd.f32 0.0, %v534
    %v536 = vpop.f32.mrb[0].mxu0
    %v537 = vpop.f32.mrb[0].mxu0
    %v538 = vadd.f32 0.0, %v537
    %v539 = vpop.f32.mrb[0].mxu0
    %540 = vmatprep.mubr.bf16.mxu0 0
    %541 = vmatmul.mubr.bf16.gmra.mrb[0].mxu0 %v270
    %v542 = vpop.f32.mrb[0].mxu0
    %v543 = vadd.f32 0.0, %v542
    %v544 = vpop.f32.mrb[0].mxu0
    %v545 = vpop.f32.mrb[0].mxu0
    %v546 = vadd.f32 0.0, %v545
    %v547 = vpop.f32.mrb[0].mxu0
    %548 = vmatprep.mubr.bf16.mxu0 0
    %549 = vmatmul.mubr.bf16.gmra.mrb[0].mxu0 %v271
    %v550 = vpop.f32.mrb[0].mxu0
    %v551 = vadd.f32 0.0, %v550
    %v552 = vpop.f32.mrb[0].mxu0
    %v553 = vpop.f32.mrb[0].mxu0
    %v554 = vadd.f32 0.0, %v553
    %v555 = vpop.f32.mrb[0].mxu0
    %556 = vmatprep.mubr.bf16.mxu0 0
    %557 = vmatmul.mubr.bf16.gmra.mrb[0].mxu0 %v272
    %v558 = vpop.f32.mrb[0].mxu0
    %v559 = vadd.f32 0.0, %v558
    %v560 = vpop.f32.mrb[0].mxu0
    %v561 = vpop.f32.mrb[0].mxu0
    %v562 = vadd.f32 0.0, %v561
    %v563 = vpop.f32.mrb[0].mxu0
    %564 = vmatprep.mubr.bf16.mxu0 0
    %565 = vmatmul.mubr.bf16.gmra.mrb[0].mxu0 %v273
    %v566 = vpop.f32.mrb[0].mxu0
    %v567 = vadd.f32 0.0, %v566
    %v568 = vpop.f32.mrb[0].mxu0
    %v569 = vpop.f32.mrb[0].mxu0
    %v570 = vadd.f32 0.0, %v569
    %v571 = vpop.f32.mrb[0].mxu0
    %572 = vmatprep.mubr.bf16.mxu0 0
    %573 = vmatmul.mubr.bf16.gmra.mrb[0].mxu0 %v274
    %v574 = vpop.f32.mrb[0].mxu0
    %v575 = vadd.f32 0.0, %v574
    %v576 = vpop.f32.mrb[0].mxu0
    %v577 = vpop.f32.mrb[0].mxu0
    %v578 = vadd.f32 0.0, %v577
    %v579 = vpop.f32.mrb[0].mxu0
    %580 = vmatprep.mubr.bf16.mxu0 0
    %581 = vmatmul.mubr.bf16.gmra.mrb[0].mxu0 %v275
    %v582 = vpop.f32.mrb[0].mxu0
    %v583 = vadd.f32 0.0, %v582
    %v584 = vpop.f32.mrb[0].mxu0
    %v585 = vpop.f32.mrb[0].mxu0
    %v586 = vadd.f32 0.0, %v585
    %v587 = vpop.f32.mrb[0].mxu0
    %588 = vmatprep.mubr.bf16.mxu0 0
    %589 = vmatmul.mubr.bf16.gmra.mrb[0].mxu0 %v276
    %v590 = vpop.f32.mrb[0].mxu0
    %v591 = vadd.f32 0.0, %v590
    %v592 = vpop.f32.mrb[0].mxu0
    %v593 = vpop.f32.mrb[0].mxu0
    %v594 = vadd.f32 0.0, %v593
    %v595 = vpop.f32.mrb[0].mxu0
    %596 = vmatprep.mubr.bf16.mxu0 0
    %597 = vmatmul.mubr.bf16.gmra.mrb[0].mxu0 %v277
    %v598 = vpop.f32.mrb[0].mxu0
    %v599 = vadd.f32 0.0, %v598
    %v600 = vpop.f32.mrb[0].mxu0
    %v601 = vpop.f32.mrb[0].mxu0
    %v602 = vadd.f32 0.0, %v601
    %v603 = vpop.f32.mrb[0].mxu0
    %604 = vmatprep.mubr.bf16.mxu0 0
    %605 = vmatmul.mubr.bf16.gmra.mrb[0].mxu0 %v278
    %v606 = vpop.f32.mrb[0].mxu0
    %v607 = vadd.f32 0.0, %v606
    %v608 = vpop.f32.mrb[0].mxu0
    %v609 = vpop.f32.mrb[0].mxu0
    %v610 = vadd.f32 0.0, %v609
    %v611 = vpop.f32.mrb[0].mxu0
    %612 = vmatprep.mubr.bf16.mxu0 0
    %613 = vmatmul.mubr.bf16.gmra.mrb[0].mxu0 %v279
    %v614 = vpop.f32.mrb[0].mxu0
    %v615 = vadd.f32 0.0, %v614
    %v616 = vpop.f32.mrb[0].mxu0
    %v617 = vpop.f32.mrb[0].mxu0
    %v618 = vadd.f32 0.0, %v617
    %v619 = vpop.f32.mrb[0].mxu0
    %620 = vmatprep.mubr.bf16.mxu0 0
    %621 = vmatmul.mubr.bf16.gmra.mrb[0].mxu0 %v280
    %v622 = vpop.f32.mrb[0].mxu0
    %v623 = vadd.f32 0.0, %v622
    %v624 = vpop.f32.mrb[0].mxu0
    %v625 = vpop.f32.mrb[0].mxu0
    %v626 = vadd.f32 0.0, %v625
    %v627 = vpop.f32.mrb[0].mxu0
    %628 = vmatprep.mubr.bf16.mxu0 0
    %629 = vmatmul.mubr.bf16.gmra.mrb[0].mxu0 %v281
    %v630 = vpop.f32.mrb[0].mxu0
    %v631 = vadd.f32 0.0, %v630
    %v632 = vpop.f32.mrb[0].mxu0
    %v633 = vpop.f32.mrb[0].mxu0
    %v634 = vadd.f32 0.0, %v633
    %v635 = vpop.f32.mrb[0].mxu0
    %636 = vmatprep.mubr.bf16.mxu0 0
    %637 = vmatmul.mubr.bf16.gmra.mrb[0].mxu0 %v282
    %v638 = vpop.f32.mrb[0].mxu0
    %v639 = vadd.f32 0.0, %v638
    %v640 = vpop.f32.mrb[0].mxu0
    %v641 = vpop.f32.mrb[0].mxu0
    %v642 = vadd.f32 0.0, %v641
    %v643 = vpop.f32.mrb[0].mxu0
    %644 = vmatprep.mubr.bf16.mxu0 0
    %645 = vmatmul.mubr.bf16.gmra.mrb[0].mxu0 %v283
    %v646 = vpop.f32.mrb[0].mxu0
    %v647 = vadd.f32 0.0, %v646
    %v648 = vpop.f32.mrb[0].mxu0
    %v649 = vpop.f32.mrb[0].mxu0
    %v650 = vadd.f32 0.0, %v649
    %v651 = vpop.f32.mrb[0].mxu0
    %652 = vdwg.mxu0
    %v653 = vadd.f32 %v399, %v402
    %v654 = vadd.f32 %v653, %v407
    %v655 = vadd.f32 %v654, %v410
    %v656 = vadd.f32 %v655, %v415
    %v657 = vadd.f32 %v656, %v418
    %v658 = vadd.f32 %v657, %v423
    %v659 = vadd.f32 %v658, %v426
    %v660 = vadd.f32 %v659, %v431
    %v661 = vadd.f32 %v660, %v434
    %v662 = vadd.f32 %v661, %v439
    %v663 = vadd.f32 %v662, %v442
    %v664 = vadd.f32 %v663, %v447
    %v665 = vadd.f32 %v664, %v450
    %v666 = vadd.f32 %v665, %v455
    %v667 = vadd.f32 %v666, %v458
    %v668 = vadd.f32 %v667, %v463
    %v669 = vadd.f32 %v668, %v466
    %v670 = vadd.f32 %v669, %v471
    %v671 = vadd.f32 %v670, %v474
    %v672 = vadd.f32 %v671, %v479
    %v673 = vadd.f32 %v672, %v482
    %v674 = vadd.f32 %v673, %v487
    %v675 = vadd.f32 %v674, %v490
    %v676 = vadd.f32 %v675, %v495
    %v677 = vadd.f32 %v676, %v498
    %v678 = vadd.f32 %v677, %v503
    %v679 = vadd.f32 %v678, %v506
    %v680 = vadd.f32 %v679, %v511
    %v681 = vadd.f32 %v680, %v514
    %v682 = vadd.f32 %v681, %v519
    %v683 = vadd.f32 %v682, %v522
    %v684 = vadd.f32 %v683, %v527
    %v685 = vadd.f32 %v684, %v530
    %v686 = vadd.f32 %v685, %v535
    %v687 = vadd.f32 %v686, %v538
    %v688 = vadd.f32 %v687, %v543
    %v689 = vadd.f32 %v688, %v546
    %v690 = vadd.f32 %v689, %v551
    %v691 = vadd.f32 %v690, %v554
    %v692 = vadd.f32 %v691, %v559
    %v693 = vadd.f32 %v692, %v562
    %v694 = vadd.f32 %v693, %v567
    %v695 = vadd.f32 %v694, %v570
    %v696 = vadd.f32 %v695, %v575
    %v697 = vadd.f32 %v696, %v578
    %v698 = vadd.f32 %v697, %v583
    %v699 = vadd.f32 %v698, %v586
    %v700 = vadd.f32 %v699, %v591
    %v701 = vadd.f32 %v700, %v594
    %v702 = vadd.f32 %v701, %v599
    %v703 = vadd.f32 %v702, %v602
    %v704 = vadd.f32 %v703, %v607
    %v705 = vadd.f32 %v704, %v610
    %v706 = vadd.f32 %v705, %v615
    %v707 = vadd.f32 %v706, %v618
    %v708 = vadd.f32 %v707, %v623
    %v709 = vadd.f32 %v708, %v626
    %v710 = vadd.f32 %v709, %v631
    %v711 = vadd.f32 %v710, %v634
    %v712 = vadd.f32 %v711, %v639
    %v713 = vadd.f32 %v712, %v642
    %v714 = vadd.f32 %v713, %v647
    %v715 = vadd.f32 %v714, %v650
    %v716 = vrot.slane %v715, 4
    %v717 = vadd.f32 %v715, %v716
    %v718 = vrot.slane %v717, 2
    %v719 = vadd.f32 %v717, %v718
    %v720 = vrot.slane %v719, 1
    %v721 = vadd.f32 %v719, %v720
    %722 = vst [vmem:[#allocation8] sm:$0x1] %v721
    %v723 = vmul.f32 %v399, %v399
    %v724 = vmul.f32 %v402, %v402
    %v725 = vmul.f32 %v407, %v407
    %v726 = vmul.f32 %v410, %v410
    %v727 = vmul.f32 %v415, %v415
    %v728 = vmul.f32 %v418, %v418
    %v729 = vmul.f32 %v423, %v423
    %v730 = vmul.f32 %v426, %v426
    %v731 = vmul.f32 %v431, %v431
    %v732 = vmul.f32 %v434, %v434
    %v733 = vmul.f32 %v439, %v439
    %v734 = vmul.f32 %v442, %v442
    %v735 = vmul.f32 %v447, %v447
    %v736 = vmul.f32 %v450, %v450
    %v737 = vmul.f32 %v455, %v455
    %v738 = vmul.f32 %v458, %v458
    %v739 = vmul.f32 %v463, %v463
    %v740 = vmul.f32 %v466, %v466
    %v741 = vmul.f32 %v471, %v471
    %v742 = vmul.f32 %v474, %v474
    %v743 = vmul.f32 %v479, %v479
    %v744 = vmul.f32 %v482, %v482
    %v745 = vmul.f32 %v487, %v487
    %v746 = vmul.f32 %v490, %v490
    %v747 = vmul.f32 %v495, %v495
    %v748 = vmul.f32 %v498, %v498
    %v749 = vmul.f32 %v503, %v503
    %v750 = vmul.f32 %v506, %v506
    %v751 = vmul.f32 %v511, %v511
    %v752 = vmul.f32 %v514, %v514
    %v753 = vmul.f32 %v519, %v519
    %v754 = vmul.f32 %v522, %v522
    %v755 = vmul.f32 %v527, %v527
    %v756 = vmul.f32 %v530, %v530
    %v757 = vmul.f32 %v535, %v535
    %v758 = vmul.f32 %v538, %v538
    %v759 = vmul.f32 %v543, %v543
    %v760 = vmul.f32 %v546, %v546
    %v761 = vmul.f32 %v551, %v551
    %v762 = vmul.f32 %v554, %v554
    %v763 = vmul.f32 %v559, %v559
    %v764 = vmul.f32 %v562, %v562
    %v765 = vmul.f32 %v567, %v567
    %v766 = vmul.f32 %v570, %v570
    %v767 = vmul.f32 %v575, %v575
    %v768 = vmul.f32 %v578, %v578
    %v769 = vmul.f32 %v583, %v583
    %v770 = vmul.f32 %v586, %v586
    %v771 = vmul.f32 %v591, %v591
    %v772 = vmul.f32 %v594, %v594
    %v773 = vmul.f32 %v599, %v599
    %v774 = vmul.f32 %v602, %v602
    %v775 = vmul.f32 %v607, %v607
    %v776 = vmul.f32 %v610, %v610
    %v777 = vmul.f32 %v615, %v615
    %v778 = vmul.f32 %v618, %v618
    %v779 = vmul.f32 %v623, %v623
    %v780 = vmul.f32 %v626, %v626
    %v781 = vmul.f32 %v631, %v631
    %v782 = vmul.f32 %v634, %v634
    %v783 = vmul.f32 %v639, %v639
    %v784 = vmul.f32 %v642, %v642
    %v785 = vmul.f32 %v647, %v647
    %v786 = vmul.f32 %v650, %v650
    %v787 = vadd.f32 %v723, %v724
    %v788 = vadd.f32 %v787, %v725
    %v789 = vadd.f32 %v788, %v726
    %v790 = vadd.f32 %v789, %v727
    %v791 = vadd.f32 %v790, %v728
    %v792 = vadd.f32 %v791, %v729
    %v793 = vadd.f32 %v792, %v730
    %v794 = vadd.f32 %v793, %v731
    %v795 = vadd.f32 %v794, %v732
    %v796 = vadd.f32 %v795, %v733
    %v797 = vadd.f32 %v796, %v734
    %v798 = vadd.f32 %v797, %v735
    %v799 = vadd.f32 %v798, %v736
    %v800 = vadd.f32 %v799, %v737
    %v801 = vadd.f32 %v800, %v738
    %v802 = vadd.f32 %v801, %v739
    %v803 = vadd.f32 %v802, %v740
    %v804 = vadd.f32 %v803, %v741
    %v805 = vadd.f32 %v804, %v742
    %v806 = vadd.f32 %v805, %v743
    %v807 = vadd.f32 %v806, %v744
    %v808 = vadd.f32 %v807, %v745
    %v809 = vadd.f32 %v808, %v746
    %v810 = vadd.f32 %v809, %v747
    %v811 = vadd.f32 %v810, %v748
    %v812 = vadd.f32 %v811, %v749
    %v813 = vadd.f32 %v812, %v750
    %v814 = vadd.f32 %v813, %v751
    %v815 = vadd.f32 %v814, %v752
    %v816 = vadd.f32 %v815, %v753
    %v817 = vadd.f32 %v816, %v754
    %v818 = vadd.f32 %v817, %v755
    %v819 = vadd.f32 %v818, %v756
    %v820 = vadd.f32 %v819, %v757
    %v821 = vadd.f32 %v820, %v758
    %v822 = vadd.f32 %v821, %v759
    %v823 = vadd.f32 %v822, %v760
    %v824 = vadd.f32 %v823, %v761
    %v825 = vadd.f32 %v824, %v762
    %v826 = vadd.f32 %v825, %v763
    %v827 = vadd.f32 %v826, %v764
    %v828 = vadd.f32 %v827, %v765
    %v829 = vadd.f32 %v828, %v766
    %v830 = vadd.f32 %v829, %v767
    %v831 = vadd.f32 %v830, %v768
    %v832 = vadd.f32 %v831, %v769
    %v833 = vadd.f32 %v832, %v770
    %v834 = vadd.f32 %v833, %v771
    %v835 = vadd.f32 %v834, %v772
    %v836 = vadd.f32 %v835, %v773
    %v837 = vadd.f32 %v836, %v774
    %v838 = vadd.f32 %v837, %v775
    %v839 = vadd.f32 %v838, %v776
    %v840 = vadd.f32 %v839, %v777
    %v841 = vadd.f32 %v840, %v778
    %v842 = vadd.f32 %v841, %v779
    %v843 = vadd.f32 %v842, %v780
    %v844 = vadd.f32 %v843, %v781
    %v845 = vadd.f32 %v844, %v782
    %v846 = vadd.f32 %v845, %v783
    %v847 = vadd.f32 %v846, %v784
    %v848 = vadd.f32 %v847, %v785
    %v849 = vadd.f32 %v848, %v786
    %v850 = vrot.slane %v849, 4
    %v851 = vadd.f32 %v849, %v850
    %v852 = vrot.slane %v851, 2
    %v853 = vadd.f32 %v851, %v852
    %v854 = vrot.slane %v853, 1
    %v855 = vadd.f32 %v853, %v854
    %856 = vst [vmem:[#allocation8 + $0x1] sm:$0x1] %v855
    %v857 = vpack.c.bf16 %v402, %v399
    %v858 = vpack.c.bf16 %v410, %v407
    %v859 = vpack.c.bf16 %v418, %v415
    %v860 = vpack.c.bf16 %v426, %v423
    %v861 = vpack.c.bf16 %v434, %v431
    %v862 = vpack.c.bf16 %v442, %v439
    %v863 = vpack.c.bf16 %v450, %v447
    %v864 = vpack.c.bf16 %v458, %v455
    %v865 = vpack.c.bf16 %v466, %v463
    %v866 = vpack.c.bf16 %v474, %v471
    %v867 = vpack.c.bf16 %v482, %v479
    %v868 = vpack.c.bf16 %v490, %v487
    %v869 = vpack.c.bf16 %v498, %v495
    %v870 = vpack.c.bf16 %v506, %v503
    %v871 = vpack.c.bf16 %v514, %v511
    %v872 = vpack.c.bf16 %v522, %v519
    %v873 = vpack.c.bf16 %v530, %v527
    %v874 = vpack.c.bf16 %v538, %v535
    %v875 = vpack.c.bf16 %v546, %v543
    %v876 = vpack.c.bf16 %v554, %v551
    %v877 = vpack.c.bf16 %v562, %v559
    %v878 = vpack.c.bf16 %v570, %v567
    %v879 = vpack.c.bf16 %v578, %v575
    %v880 = vpack.c.bf16 %v586, %v583
    %v881 = vpack.c.bf16 %v594, %v591
    %v882 = vpack.c.bf16 %v602, %v599
    %v883 = vpack.c.bf16 %v610, %v607
    %v884 = vpack.c.bf16 %v618, %v615
    %v885 = vpack.c.bf16 %v626, %v623
    %v886 = vpack.c.bf16 %v634, %v631
    %v887 = vpack.c.bf16 %v642, %v639
    %v888 = vpack.c.bf16 %v650, %v647
    %v921 = vunpack.c.l.b16 %v857
    %v922 = vunpack.c.h.b16 %v857
    %v923 = vunpack.c.l.b16 %v858
    %v924 = vunpack.c.h.b16 %v858
    %v925 = vunpack.c.l.b16 %v859
    %v926 = vunpack.c.h.b16 %v859
    %v927 = vunpack.c.l.b16 %v860
    %v928 = vunpack.c.h.b16 %v860
    %v929 = vunpack.c.l.b16 %v861
    %v930 = vunpack.c.h.b16 %v861
    %v931 = vunpack.c.l.b16 %v862
    %v932 = vunpack.c.h.b16 %v862
    %v933 = vunpack.c.l.b16 %v863
    %v934 = vunpack.c.h.b16 %v863
    %v935 = vunpack.c.l.b16 %v864
    %v936 = vunpack.c.h.b16 %v864
    %v937 = vunpack.c.l.b16 %v865
    %v938 = vunpack.c.h.b16 %v865
    %v939 = vunpack.c.l.b16 %v866
    %v940 = vunpack.c.h.b16 %v866
    %v941 = vunpack.c.l.b16 %v867
    %v942 = vunpack.c.h.b16 %v867
    %v943 = vunpack.c.l.b16 %v868
    %v944 = vunpack.c.h.b16 %v868
    %v945 = vunpack.c.l.b16 %v869
    %v946 = vunpack.c.h.b16 %v869
    %v947 = vunpack.c.l.b16 %v870
    %v948 = vunpack.c.h.b16 %v870
    %v949 = vunpack.c.l.b16 %v871
    %v950 = vunpack.c.h.b16 %v871
    %v951 = vunpack.c.l.b16 %v872
    %v952 = vunpack.c.h.b16 %v872
    %v953 = vunpack.c.l.b16 %v873
    %v954 = vunpack.c.h.b16 %v873
    %v955 = vunpack.c.l.b16 %v874
    %v956 = vunpack.c.h.b16 %v874
    %v957 = vunpack.c.l.b16 %v875
    %v958 = vunpack.c.h.b16 %v875
    %v959 = vunpack.c.l.b16 %v876
    %v960 = vunpack.c.h.b16 %v876
    %v961 = vunpack.c.l.b16 %v877
    %v962 = vunpack.c.h.b16 %v877
    %v963 = vunpack.c.l.b16 %v878
    %v964 = vunpack.c.h.b16 %v878
    %v965 = vunpack.c.l.b16 %v879
    %v966 = vunpack.c.h.b16 %v879
    %v967 = vunpack.c.l.b16 %v880
    %v968 = vunpack.c.h.b16 %v880
    %v969 = vunpack.c.l.b16 %v881
    %v970 = vunpack.c.h.b16 %v881
    %v971 = vunpack.c.l.b16 %v882
    %v972 = vunpack.c.h.b16 %v882
    %v973 = vunpack.c.l.b16 %v883
    %v974 = vunpack.c.h.b16 %v883
    %v975 = vunpack.c.l.b16 %v884
    %v976 = vunpack.c.h.b16 %v884
    %v977 = vunpack.c.l.b16 %v885
    %v978 = vunpack.c.h.b16 %v885
    %v979 = vunpack.c.l.b16 %v886
    %v980 = vunpack.c.h.b16 %v886
    %v981 = vunpack.c.l.b16 %v887
    %v982 = vunpack.c.h.b16 %v887
    %v983 = vunpack.c.l.b16 %v888
    %v984 = vunpack.c.h.b16 %v888
    %v985 = vpack.c.b16 %v921, %v921
    %v986 = vpack.c.b16 %v922, %v922
    %v987 = vpack.c.b16 %v923, %v923
    %v988 = vpack.c.b16 %v924, %v924
    %v989 = vpack.c.b16 %v925, %v925
    %v990 = vpack.c.b16 %v926, %v926
    %v991 = vpack.c.b16 %v927, %v927
    %v992 = vpack.c.b16 %v928, %v928
    %v993 = vpack.c.b16 %v929, %v929
    %v994 = vpack.c.b16 %v930, %v930
    %v995 = vpack.c.b16 %v931, %v931
    %v996 = vpack.c.b16 %v932, %v932
    %v997 = vpack.c.b16 %v933, %v933
    %v998 = vpack.c.b16 %v934, %v934
    %v999 = vpack.c.b16 %v935, %v935
    %v1000 = vpack.c.b16 %v936, %v936
    %v1001 = vpack.c.b16 %v937, %v937
    %v1002 = vpack.c.b16 %v938, %v938
    %v1003 = vpack.c.b16 %v939, %v939
    %v1004 = vpack.c.b16 %v940, %v940
    %v1005 = vpack.c.b16 %v941, %v941
    %v1006 = vpack.c.b16 %v942, %v942
    %v1007 = vpack.c.b16 %v943, %v943
    %v1008 = vpack.c.b16 %v944, %v944
    %v1009 = vpack.c.b16 %v945, %v945
    %v1010 = vpack.c.b16 %v946, %v946
    %v1011 = vpack.c.b16 %v947, %v947
    %v1012 = vpack.c.b16 %v948, %v948
    %v1013 = vpack.c.b16 %v949, %v949
    %v1014 = vpack.c.b16 %v950, %v950
    %v1015 = vpack.c.b16 %v951, %v951
    %v1016 = vpack.c.b16 %v952, %v952
    %v1017 = vpack.c.b16 %v953, %v953
    %v1018 = vpack.c.b16 %v954, %v954
    %v1019 = vpack.c.b16 %v955, %v955
    %v1020 = vpack.c.b16 %v956, %v956
    %v1021 = vpack.c.b16 %v957, %v957
    %v1022 = vpack.c.b16 %v958, %v958
    %v1023 = vpack.c.b16 %v959, %v959
    %v1024 = vpack.c.b16 %v960, %v960
    %v1025 = vpack.c.b16 %v961, %v961
    %v1026 = vpack.c.b16 %v962, %v962
    %v1027 = vpack.c.b16 %v963, %v963
    %v1028 = vpack.c.b16 %v964, %v964
    %v1029 = vpack.c.b16 %v965, %v965
    %v1030 = vpack.c.b16 %v966, %v966
    %v1031 = vpack.c.b16 %v967, %v967
    %v1032 = vpack.c.b16 %v968, %v968
    %v1033 = vpack.c.b16 %v969, %v969
    %v1034 = vpack.c.b16 %v970, %v970
    %v1035 = vpack.c.b16 %v971, %v971
    %v1036 = vpack.c.b16 %v972, %v972
    %v1037 = vpack.c.b16 %v973, %v973
    %v1038 = vpack.c.b16 %v974, %v974
    %v1039 = vpack.c.b16 %v975, %v975
    %v1040 = vpack.c.b16 %v976, %v976
    %v1041 = vpack.c.b16 %v977, %v977
    %v1042 = vpack.c.b16 %v978, %v978
    %v1043 = vpack.c.b16 %v979, %v979
    %v1044 = vpack.c.b16 %v980, %v980
    %v1045 = vpack.c.b16 %v981, %v981
    %v1046 = vpack.c.b16 %v982, %v982
    %v1047 = vpack.c.b16 %v983, %v983
    %v1048 = vpack.c.b16 %v984, %v984
    %1113 = vst [vmem:[#allocation7] sm:$0xf] %v985
    %1114 = vst [vmem:[#allocation7 + $0x4] sm:$0xf] %v986
    %1115 = vst [vmem:[#allocation7 + $0x8] sm:$0xf] %v987
    %1116 = vst [vmem:[#allocation7 + $0xc] sm:$0xf] %v988
    %1117 = vst [vmem:[#allocation7 + $0x10] sm:$0xf] %v989
    %1118 = vst [vmem:[#allocation7 + $0x14] sm:$0xf] %v990
    %1119 = vst [vmem:[#allocation7 + $0x18] sm:$0xf] %v991
    %1120 = vst [vmem:[#allocation7 + $0x1c] sm:$0xf] %v992
    %1121 = vst [vmem:[#allocation7 + $0x20] sm:$0xf] %v993
    %1122 = vst [vmem:[#allocation7 + $0x24] sm:$0xf] %v994
    %1123 = vst [vmem:[#allocation7 + $0x28] sm:$0xf] %v995
    %1124 = vst [vmem:[#allocation7 + $0x2c] sm:$0xf] %v996
    %1125 = vst [vmem:[#allocation7 + $0x30] sm:$0xf] %v997
    %1126 = vst [vmem:[#allocation7 + $0x34] sm:$0xf] %v998
    %1127 = vst [vmem:[#allocation7 + $0x38] sm:$0xf] %v999
    %1128 = vst [vmem:[#allocation7 + $0x3c] sm:$0xf] %v1000
    %1129 = vst [vmem:[#allocation7 + $0x40] sm:$0xf] %v1001
    %1130 = vst [vmem:[#allocation7 + $0x44] sm:$0xf] %v1002
    %1131 = vst [vmem:[#allocation7 + $0x48] sm:$0xf] %v1003
    %1132 = vst [vmem:[#allocation7 + $0x4c] sm:$0xf] %v1004
    %1133 = vst [vmem:[#allocation7 + $0x50] sm:$0xf] %v1005
    %1134 = vst [vmem:[#allocation7 + $0x54] sm:$0xf] %v1006
    %1135 = vst [vmem:[#allocation7 + $0x58] sm:$0xf] %v1007
    %1136 = vst [vmem:[#allocation7 + $0x5c] sm:$0xf] %v1008
    %1137 = vst [vmem:[#allocation7 + $0x60] sm:$0xf] %v1009
    %1138 = vst [vmem:[#allocation7 + $0x64] sm:$0xf] %v1010
    %1139 = vst [vmem:[#allocation7 + $0x68] sm:$0xf] %v1011
    %1140 = vst [vmem:[#allocation7 + $0x6c] sm:$0xf] %v1012
    %1141 = vst [vmem:[#allocation7 + $0x70] sm:$0xf] %v1013
    %1142 = vst [vmem:[#allocation7 + $0x74] sm:$0xf] %v1014
    %1143 = vst [vmem:[#allocation7 + $0x78] sm:$0xf] %v1015
    %1144 = vst [vmem:[#allocation7 + $0x7c] sm:$0xf] %v1016
    %1145 = vst [vmem:[#allocation7 + $0x80] sm:$0xf] %v1017
    %1146 = vst [vmem:[#allocation7 + $0x84] sm:$0xf] %v1018
    %1147 = vst [vmem:[#allocation7 + $0x88] sm:$0xf] %v1019
    %1148 = vst [vmem:[#allocation7 + $0x8c] sm:$0xf] %v1020
    %1149 = vst [vmem:[#allocation7 + $0x90] sm:$0xf] %v1021
    %1150 = vst [vmem:[#allocation7 + $0x94] sm:$0xf] %v1022
    %1151 = vst [vmem:[#allocation7 + $0x98] sm:$0xf] %v1023
    %1152 = vst [vmem:[#allocation7 + $0x9c] sm:$0xf] %v1024
    %1153 = vst [vmem:[#allocation7 + $0xa0] sm:$0xf] %v1025
    %1154 = vst [vmem:[#allocation7 + $0xa4] sm:$0xf] %v1026
    %1155 = vst [vmem:[#allocation7 + $0xa8] sm:$0xf] %v1027
    %1156 = vst [vmem:[#allocation7 + $0xac] sm:$0xf] %v1028
    %1157 = vst [vmem:[#allocation7 + $0xb0] sm:$0xf] %v1029
    %1158 = vst [vmem:[#allocation7 + $0xb4] sm:$0xf] %v1030
    %1159 = vst [vmem:[#allocation7 + $0xb8] sm:$0xf] %v1031
    %1160 = vst [vmem:[#allocation7 + $0xbc] sm:$0xf] %v1032
    %1161 = vst [vmem:[#allocation7 + $0xc0] sm:$0xf] %v1033
    %1162 = vst [vmem:[#allocation7 + $0xc4] sm:$0xf] %v1034
    %1163 = vst [vmem:[#allocation7 + $0xc8] sm:$0xf] %v1035
    %1164 = vst [vmem:[#allocation7 + $0xcc] sm:$0xf] %v1036
    %1165 = vst [vmem:[#allocation7 + $0xd0] sm:$0xf] %v1037
    %1166 = vst [vmem:[#allocation7 + $0xd4] sm:$0xf] %v1038
    %1167 = vst [vmem:[#allocation7 + $0xd8] sm:$0xf] %v1039
    %1168 = vst [vmem:[#allocation7 + $0xdc] sm:$0xf] %v1040
    %1169 = vst [vmem:[#allocation7 + $0xe0] sm:$0xf] %v1041
    %1170 = vst [vmem:[#allocation7 + $0xe4] sm:$0xf] %v1042
    %1171 = vst [vmem:[#allocation7 + $0xe8] sm:$0xf] %v1043
    %1172 = vst [vmem:[#allocation7 + $0xec] sm:$0xf] %v1044
    %1173 = vst [vmem:[#allocation7 + $0xf0] sm:$0xf] %v1045
    %1174 = vst [vmem:[#allocation7 + $0xf4] sm:$0xf] %v1046
    %1175 = vst [vmem:[#allocation7 + $0xf8] sm:$0xf] %v1047
    %1176 = vst [vmem:[#allocation7 + $0xfc] sm:$0xf] %v1048
    // Predicated region
    $region18: #{tpu_custom_call.1} parent=1 // pred_check
      _
    $region19: #{tpu_custom_call.1} parent=1 // pred_check_branch
      %1178 = sbr.rel (0) target = $region21
    $region20: #{tpu_custom_call.1} parent=1 // pred_region
      %s1180 = ssub.s32 4096, 4096
      %1181 = vsyncadd [#allocation4], %s1180
      %s1182 = sshll.u32 [#allocation7], 4
      %s1183 = int_to_ptr.vmem [resolvable:$true] %s1182
      %1188 = dma.vmem_to_hbm [thread:$0]  %s1183, 4096, %s2, [#allocation4], 64, 64, 4
    $region21: #{tpu_custom_call.1} parent=1 // pred_fallthru
      _
    // Predicated region
    $region22: #{tpu_custom_call.1} parent=1 // pred_check
      _
    $region23: #{tpu_custom_call.1} parent=1 // pred_check_branch
      %1190 = sbr.rel (0) target = $region25
    $region24: #{tpu_custom_call.1} parent=1 // pred_region
      %s1192 = ssub.s32 128, 128
      %1193 = vsyncadd [#allocation9], %s1192
      %s1195 = sshll.u32 [#allocation8], 4
      %s1196 = int_to_ptr.vmem [resolvable:$true] %s1195
      %1198 = dma.vmem_to_hbm [thread:$0]  %s1196, 128, %s3, [#allocation9]
    $region25: #{tpu_custom_call.1} parent=1 // pred_fallthru
      _
    // Predicated region
    $region26: #{tpu_custom_call.1} parent=1 // pred_check
      _
    $region27: #{tpu_custom_call.1} parent=1 // pred_check_branch
      %1200 = sbr.rel (0) target = $region29
    $region28: #{tpu_custom_call.1} parent=1 // pred_region
      %1201 = dma.done [#allocation4], 4096
    $region29: #{tpu_custom_call.1} parent=1 // pred_fallthru
      _
    // Predicated region
    $region30: #{tpu_custom_call.1} parent=1 // pred_check
      _
    $region31: #{tpu_custom_call.1} parent=1 // pred_check_branch
      %1203 = sbr.rel (0) target = $region33
    $region32: #{tpu_custom_call.1} parent=1 // pred_region
      %1204 = dma.done [#allocation9], 128
    $region33: #{tpu_custom_call.1} parent=1 // pred_fallthru
      _
    %1205 = vsyncpa [#allocation3], 1
    %1206 = vsyncpa [#allocation6], 1
    %1207 = vsyncpa [#allocation4], 1
    %1208 = vsyncpa [#allocation9], 1

</llo_original>
